<compile_context>
chip_gen: v6e
topology: v6e:2x2x1
jax: 0.10.0
libtpu: 0.0.40
codegen_flags: <defaults>
</compile_context>

<pallas_src>
import functools

import jax
import jax.numpy as jnp
from jax import lax
from jax.experimental import pallas as pl
from jax.experimental.pallas import tpu as pltpu

EPS = 1e-5
LANE = 128


def _round_up(x, m):
    return (x + m - 1) // m * m


def _projection_head_kernel(x_hbm, w1_hbm, g1_ref, b1_ref, w2_ref, o_ref,
                            x_vmem, w1_buf, h_cache, dma_sems,
                            *, n_true, n_pad, tk, num_k):
    j = pl.program_id(0)
    inv_n = jnp.float32(1.0 / n_true)

    # ------------------------------------------------------------------
    # j == 0: run Linear1 + BN1 + ReLU exactly once, cache activations in VMEM.
    # ------------------------------------------------------------------
    @pl.when(j == 0)
    def _():
        # x: one DMA for the whole (padded) batch; single-buffered by construction.
        x_copy = pltpu.make_async_copy(x_hbm, x_vmem, dma_sems.at[2])
        x_copy.start()
        # Prefetch the first W1 tile while x is in flight.
        pltpu.make_async_copy(w1_hbm.at[0:tk, :], w1_buf.at[0], dma_sems.at[0]).start()
        x_copy.wait()

        if n_pad != n_true:
            row_mask = lax.broadcasted_iota(jnp.int32, (n_pad, 1), 0) < n_true

        for k in range(num_k):  # static unroll; num_k = d_out_p / tk is small
            slot = k % 2
            nxt = 1 - slot
            # Prefetch the next W1 tile before waiting on the current one.
            if k + 1 < num_k:
                pltpu.make_async_copy(w1_hbm.at[(k + 1) * tk:(k + 2) * tk, :],
                                      w1_buf.at[nxt], dma_sems.at[nxt]).start()
            pltpu.make_async_copy(w1_hbm.at[k * tk:(k + 1) * tk, :],
                                  w1_buf.at[slot], dma_sems.at[slot]).wait()

            # Linear1 (bias=False) tile: h_k = x @ W1[k_tile]^T, f32 MXU accumulation.
            h = lax.dot_general(x_vmem[...], w1_buf[slot],
                                dimension_numbers=(((1,), (1,)), ((), ())),
                                preferred_element_type=jnp.float32)  # (n_pad, tk)

            # BatchNorm1d(affine=True), batch stats, single fused reduction pass.
            # Zero-padded batch rows are neutral for the sums; divisor is true N.
            s = jnp.sum(h, axis=0, keepdims=True)
            ss = jnp.sum(h * h, axis=0, keepdims=True)
            mean = s * inv_n
            var = jnp.maximum(ss * inv_n - mean * mean, 0.0)
            scale = g1_ref[:, k * tk:(k + 1) * tk] * lax.rsqrt(var + EPS)
            shift = b1_ref[:, k * tk:(k + 1) * tk] - mean * scale
            # Folded BN affine + ReLU.  (Padded hidden cols have gamma=beta=0 -> 0.)
            h = jnp.maximum(h * scale + shift, 0.0)
            if n_pad != n_true:
                # Keep padded batch rows at zero so they don't pollute BN2 stats.
                h = jnp.where(row_mask, h, 0.0)
            h_cache[:, k * tk:(k + 1) * tk] = h.astype(h_cache.dtype)

    # ------------------------------------------------------------------
    # Every j: Linear2 tile from the cached activations (full hidden contraction).
    # ------------------------------------------------------------------
    z = lax.dot_general(h_cache[...], w2_ref[...],
                        dimension_numbers=(((1,), (1,)), ((), ())),
                        preferred_element_type=jnp.float32)          # (n_pad, tj)

    # BatchNorm1d(affine=False), batch stats, then store the lane-dense tile.
    s2 = jnp.sum(z, axis=0, keepdims=True)
    ss2 = jnp.sum(z * z, axis=0, keepdims=True)
    mean2 = s2 * inv_n
    var2 = jnp.maximum(ss2 * inv_n - mean2 * mean2, 0.0)
    o_ref[...] = ((z - mean2) * lax.rsqrt(var2 + EPS)).astype(o_ref.dtype)


def _derive_vmem_limit(n_p, d_in_p, d_out_p, tj, tk, mm_isz, out_isz):
    used = (n_p * d_in_p * mm_isz            # x_vmem (single-buffered)
            + 2 * tk * d_in_p * mm_isz       # W1 manual double buffer
            + n_p * d_out_p * mm_isz         # h cache
            + 2 * tj * d_out_p * mm_isz      # W2 auto double buffer
            + 2 * n_p * tj * out_isz         # output block double buffer
            + 2 * 2 * d_out_p * 4            # gamma/beta (f32) double buffer
            + 2 * n_p * max(tj, tk) * 4)     # f32 temporaries (h / z tiles)
    return min(max(int(used * 1.25) + (4 << 20), 32 << 20), 112 << 20)


def projection_head(x, w1, gamma1, beta1, w2, *, tile_j=None, tile_k=None,
                    matmul_dtype=jnp.bfloat16):
    """x: (N, D_in).  w1: (D_out, D_in), w2: (D_out, D_out) — PyTorch Linear layout.

    tile_j / tile_k tile the output / hidden feature axes (multiples of 128).
    Defaults: 256 when D_out (padded) is a multiple of 256, else 128.
    On v5e pass tile_j=tile_k=128 (its MXU is 4x128x128).
    """
    n, d_in = x.shape
    d_out = w1.shape[0]
    assert w1.shape == (d_out, d_in) and w2.shape == (d_out, d_out)
    assert gamma1.shape == (d_out,) and beta1.shape == (d_out,)
    out_dtype = x.dtype
    mm_isz = jnp.dtype(matmul_dtype).itemsize

    # Lane-dense padding: features -> multiple of 128; batch -> native sublane pack.
    sub = 8 * (4 // mm_isz)                     # 8 rows for f32, 16 for bf16
    n_p = _round_up(n, sub)
    d_in_p = _round_up(d_in, LANE)
    d_out_p = _round_up(d_out, LANE)

    def _pick(t):
        if t is not None:
            return min(t, d_out_p)
        return 256 if d_out_p % 256 == 0 else 128
    tj = _pick(tile_j)
    tk = _pick(tile_k)
    assert d_out_p % tj == 0 and d_out_p % tk == 0
    num_j = d_out_p // tj
    num_k = d_out_p // tk

    def _pad_cast(a, shape, dtype):
        pads = tuple((0, s - d) for s, d in zip(shape, a.shape))
        if any(p[1] for p in pads):
            a = jnp.pad(a, pads)
        return a.astype(dtype)

    # Zero padding is neutral for both matmuls and both BN reductions
    # (the divisor is the true N).  TODO(synk): hoist weight pad/cast to init.
    x_p = _pad_cast(x, (n_p, d_in_p), matmul_dtype)
    w1_p = _pad_cast(w1, (d_out_p, d_in_p), matmul_dtype)
    w2_p = _pad_cast(w2, (d_out_p, d_out_p), matmul_dtype)
    g1_p = _pad_cast(gamma1.reshape(1, d_out), (1, d_out_p), jnp.float32)
    b1_p = _pad_cast(beta1.reshape(1, d_out), (1, d_out_p), jnp.float32)

    kernel = functools.partial(_projection_head_kernel,
                               n_true=n, n_pad=n_p, tk=tk, num_k=num_k)

    out_p = pl.pallas_call(
        kernel,
        out_shape=jax.ShapeDtypeStruct((n_p, d_out_p), out_dtype),
        grid_spec=pltpu.PrefetchScalarGridSpec(
            num_scalar_prefetch=0,
            grid=(num_j,),
            in_specs=[
                pl.BlockSpec(memory_space=pl.ANY),                 # x (HBM, manual DMA, once)
                pl.BlockSpec(memory_space=pl.ANY),                 # W1 (HBM, manual DMA, once)
                pl.BlockSpec((1, d_out_p), lambda j: (0, 0)),      # gamma1 (tiny, resident)
                pl.BlockSpec((1, d_out_p), lambda j: (0, 0)),      # beta1
                pl.BlockSpec((tj, d_out_p), lambda j: (j, 0)),     # W2 row tile, auto-pipelined
            ],
            out_specs=pl.BlockSpec((n_p, tj), lambda j: (0, j)),
            scratch_shapes=[
                pltpu.VMEM((n_p, d_in_p), matmul_dtype),           # x, resident
                pltpu.VMEM((2, tk, d_in_p), matmul_dtype),         # W1 double buffer
                pltpu.VMEM((n_p, d_out_p), matmul_dtype),          # cached ReLU(BN1(x@W1^T))
                pltpu.SemaphoreType.DMA((3,)),                     # [w1 slot0, w1 slot1, x]
            ],
        ),
        compiler_params=pltpu.CompilerParams(
            # Must be "arbitrary": j>0 steps consume the h cache written at j==0,
            # so the grid cannot be sharded across TensorCores.
            dimension_semantics=("arbitrary",),
            vmem_limit_bytes=_derive_vmem_limit(
                n_p, d_in_p, d_out_p, tj, tk, mm_isz, jnp.dtype(out_dtype).itemsize),
        ),
    )(x_p, w1_p, g1_p, b1_p, w2_p)

    return out_p[:n, :d_out]


def projection_head_ref(x, w1, gamma1, beta1, w2, matmul_dtype=jnp.float32):
    """Pure-JAX reference mirroring the kernel math (incl. matmul-operand dtype)."""
    n = x.shape[0]
    inv_n = jnp.float32(1.0 / n)
    h = jnp.dot(x.astype(matmul_dtype), w1.T.astype(matmul_dtype),
                preferred_element_type=jnp.float32)
    mean = jnp.sum(h, 0, keepdims=True) * inv_n
    var = jnp.maximum(jnp.sum(h * h, 0, keepdims=True) * inv_n - mean * mean, 0.0)
    scale = gamma1 * lax.rsqrt(var + EPS)
    shift = beta1 - mean * scale
    h = jnp.maximum(h * scale + shift, 0.0)
    z = jnp.dot(h.astype(matmul_dtype), w2.T.astype(matmul_dtype),
                preferred_element_type=jnp.float32)
    mean2 = jnp.sum(z, 0, keepdims=True) * inv_n
    var2 = jnp.maximum(jnp.sum(z * z, 0, keepdims=True) * inv_n - mean2 * mean2, 0.0)
    return (z - mean2) * lax.rsqrt(var2 + EPS)


if __name__ == "__main__":
    def run_case(n, d_in, d_out, seed, **kw):
        key = jax.random.PRNGKey(seed)
        kx, kw1, kw2, kg, kb = jax.random.split(key, 5)
        x = jax.random.normal(kx, (n, d_in), dtype=jnp.float32)
        w1 = jax.random.normal(kw1, (d_out, d_in), dtype=jnp.float32) * 0.1
        w2 = jax.random.normal(kw2, (d_out, d_out), dtype=jnp.float32) * 0.1
        gamma1 = 1.0 + 0.1 * jax.random.normal(kg, (d_out,), dtype=jnp.float32)
        beta1 = 0.1 * jax.random.normal(kb, (d_out,), dtype=jnp.float32)

        # f32-operand path: directly comparable to the PyTorch f32 module math.
        out_f32 = jax.block_until_ready(
            projection_head(x, w1, gamma1, beta1, w2, matmul_dtype=jnp.float32, **kw))
        ref_f32 = projection_head_ref(x, w1, gamma1, beta1, w2, jnp.float32)
        assert out_f32.shape == (n, d_out)
        err = float(jnp.max(jnp.abs(out_f32 - ref_f32)))
        assert jnp.allclose(out_f32, ref_f32, atol=5e-3, rtol=5e-3), f"f32 mismatch {err}"

        # bf16-operand path (MXU-preferred on v6e/v7x), f32 accumulation.
        out_bf = jax.block_until_ready(
            projection_head(x, w1, gamma1, beta1, w2, matmul_dtype=jnp.bfloat16, **kw))
        ref_bf = projection_head_ref(x, w1, gamma1, beta1, w2, jnp.bfloat16)
        err = float(jnp.max(jnp.abs(out_bf - ref_bf)))
        assert jnp.allclose(out_bf, ref_bf, atol=3e-2, rtol=3e-2), f"bf16 mismatch {err}"

    # Case A: feature padding (D_out 64 -> 128 lanes, D_in 32 -> 128), 1-tile grid.
    run_case(n=16, d_in=32, d_out=64, seed=0)
    # Case B: ragged batch (10 -> padded rows) with 128-wide tiles -> 2 output tiles
    #         and a 2-step W1 double-buffer loop (exercises the h-cache reuse path).
    run_case(n=10, d_in=48, d_out=256, seed=1, tile_j=128, tile_k=128)

    print("KERNEL_OK")
</pallas_src>

<mosaic_0001>
module attributes {stable_mosaic.version = 11 : i64} {
  func.func @_projection_head_kernel(%arg0: i32, %arg1: memref<16x128xf32, #tpu.memory_space<any>>, %arg2: memref<128x128xf32, #tpu.memory_space<any>>, %arg3: memref<1x128xf32, #tpu.memory_space<vmem>>, %arg4: memref<1x128xf32, #tpu.memory_space<vmem>>, %arg5: memref<128x128xf32, #tpu.memory_space<vmem>>, %arg6: memref<16x128xf32, #tpu.memory_space<vmem>>, %arg7: memref<16x128xf32, #tpu.memory_space<vmem>>, %arg8: memref<2x128x128xf32, #tpu.memory_space<vmem>>, %arg9: memref<16x128xf32, #tpu.memory_space<vmem>>, %arg10: memref<3x!tpu.dma_semaphore, #tpu.memory_space<semaphore_mem>>) attributes {dimension_semantics = [#tpu.dimension_semantics<arbitrary>], iteration_bounds = array<i64: 1>, scalar_prefetch = 0 : i64, scratch_operands = 4 : i64, tpu.core_type = #tpu.core_type<tc>, window_params = [{}, {}, {pipeline_mode = #tpu.pipeline_mode<synchronous>, transform_indices = @transform_2, window_bounds = array<i64: 1, 128>}, {pipeline_mode = #tpu.pipeline_mode<synchronous>, transform_indices = @transform_3, window_bounds = array<i64: 1, 128>}, {transform_indices = @transform_4, window_bounds = array<i64: 128, 128>}, {transform_indices = @transform_5, window_bounds = array<i64: 16, 128>}]} {
    %c0_i32 = arith.constant 0 : i32
    %0 = arith.cmpi eq, %arg0, %c0_i32 : i32
    %1 = arith.extui %0 : i1 to i32
    %cst = arith.constant 6.250000e-02 : f32
    %c0_i32_0 = arith.constant 0 : i32
    %2 = arith.cmpi ne, %1, %c0_i32_0 : i32
    scf.if %2 {
      %c2_i32 = arith.constant 2 : i32
      %27 = tpu.memref_slice %arg10[%c2_i32] : memref<3x!tpu.dma_semaphore, #tpu.memory_space<semaphore_mem>> -> memref<1x!tpu.dma_semaphore, #tpu.memory_space<semaphore_mem>>
      %28 = tpu.memref_squeeze %27 : memref<1x!tpu.dma_semaphore, #tpu.memory_space<semaphore_mem>> -> memref<!tpu.dma_semaphore, #tpu.memory_space<semaphore_mem>>
      tpu.enqueue_dma source(%arg1 : memref<16x128xf32, #tpu.memory_space<any>>) target(%arg7 : memref<16x128xf32, #tpu.memory_space<vmem>>) target_semaphore(%28 : memref<!tpu.dma_semaphore, #tpu.memory_space<semaphore_mem>>)
      %c0_i32_13 = arith.constant 0 : i32
      %c0_i32_14 = arith.constant 0 : i32
      %c0_i32_15 = arith.constant 0 : i32
      %c0_i32_16 = arith.constant 0 : i32
      %29 = tpu.memref_slice %arg2[%c0_i32_15, %c0_i32_16] : memref<128x128xf32, #tpu.memory_space<any>> -> memref<128x128xf32, #tpu.memory_space<any>>
      %c0_i32_17 = arith.constant 0 : i32
      %c0_i32_18 = arith.constant 0 : i32
      %30 = tpu.memref_slice %arg8[%c0_i32_13, %c0_i32_17, %c0_i32_18] : memref<2x128x128xf32, #tpu.memory_space<vmem>> -> memref<1x128x128xf32, #tpu.memory_space<vmem>>
      %31 = tpu.memref_squeeze %30 : memref<1x128x128xf32, #tpu.memory_space<vmem>> -> memref<128x128xf32, #tpu.memory_space<vmem>>
      %32 = tpu.memref_slice %arg10[%c0_i32_14] : memref<3x!tpu.dma_semaphore, #tpu.memory_space<semaphore_mem>> -> memref<1x!tpu.dma_semaphore, #tpu.memory_space<semaphore_mem>>
      %33 = tpu.memref_squeeze %32 : memref<1x!tpu.dma_semaphore, #tpu.memory_space<semaphore_mem>> -> memref<!tpu.dma_semaphore, #tpu.memory_space<semaphore_mem>>
      tpu.enqueue_dma source(%29 : memref<128x128xf32, #tpu.memory_space<any>>) target(%31 : memref<128x128xf32, #tpu.memory_space<vmem>>) target_semaphore(%33 : memref<!tpu.dma_semaphore, #tpu.memory_space<semaphore_mem>>)
      %c2_i32_19 = arith.constant 2 : i32
      %34 = tpu.memref_slice %arg10[%c2_i32_19] : memref<3x!tpu.dma_semaphore, #tpu.memory_space<semaphore_mem>> -> memref<1x!tpu.dma_semaphore, #tpu.memory_space<semaphore_mem>>
      %35 = tpu.memref_squeeze %34 : memref<1x!tpu.dma_semaphore, #tpu.memory_space<semaphore_mem>> -> memref<!tpu.dma_semaphore, #tpu.memory_space<semaphore_mem>>
      tpu.wait_dma2 semaphore(%35 : memref<!tpu.dma_semaphore, #tpu.memory_space<semaphore_mem>>) src(%arg1 : memref<16x128xf32, #tpu.memory_space<any>>) dst(%arg7 : memref<16x128xf32, #tpu.memory_space<vmem>>)
      %c0_i32_20 = arith.constant 0 : i32
      %c0_i32_21 = arith.constant 0 : i32
      %c0_i32_22 = arith.constant 0 : i32
      %c0_i32_23 = arith.constant 0 : i32
      %36 = tpu.memref_slice %arg2[%c0_i32_22, %c0_i32_23] : memref<128x128xf32, #tpu.memory_space<any>> -> memref<128x128xf32, #tpu.memory_space<any>>
      %c0_i32_24 = arith.constant 0 : i32
      %c0_i32_25 = arith.constant 0 : i32
      %37 = tpu.memref_slice %arg8[%c0_i32_20, %c0_i32_24, %c0_i32_25] : memref<2x128x128xf32, #tpu.memory_space<vmem>> -> memref<1x128x128xf32, #tpu.memory_space<vmem>>
      %38 = tpu.memref_squeeze %37 : memref<1x128x128xf32, #tpu.memory_space<vmem>> -> memref<128x128xf32, #tpu.memory_space<vmem>>
      %39 = tpu.memref_slice %arg10[%c0_i32_21] : memref<3x!tpu.dma_semaphore, #tpu.memory_space<semaphore_mem>> -> memref<1x!tpu.dma_semaphore, #tpu.memory_space<semaphore_mem>>
      %40 = tpu.memref_squeeze %39 : memref<1x!tpu.dma_semaphore, #tpu.memory_space<semaphore_mem>> -> memref<!tpu.dma_semaphore, #tpu.memory_space<semaphore_mem>>
      tpu.wait_dma2 semaphore(%40 : memref<!tpu.dma_semaphore, #tpu.memory_space<semaphore_mem>>) src(%36 : memref<128x128xf32, #tpu.memory_space<any>>) dst(%38 : memref<128x128xf32, #tpu.memory_space<vmem>>)
      %c0_26 = arith.constant 0 : index
      %c0_27 = arith.constant 0 : index
      %41 = vector.load %arg7[%c0_26, %c0_27] : memref<16x128xf32, #tpu.memory_space<vmem>>, vector<16x128xf32>
      %c0_28 = arith.constant 0 : index
      %c0_29 = arith.constant 0 : index
      %c0_30 = arith.constant 0 : index
      %42 = vector.load %arg8[%c0_28, %c0_29, %c0_30] : memref<2x128x128xf32, #tpu.memory_space<vmem>>, vector<1x128x128xf32>
      %43 = vector.shape_cast %42 : vector<1x128x128xf32> to vector<128x128xf32>
      %cst_31 = arith.constant dense<0.000000e+00> : vector<16x128xf32>
      %44 = tpu.matmul %41, %43, %cst_31 {dimension_numbers = #tpu.dot_dimension_numbers<[1], [1], [0], [0], [0, 0, 1, 0], [], []>} : vector<16x128xf32>, vector<128x128xf32>, vector<16x128xf32> -> vector<16x128xf32>
      %cst_32 = arith.constant dense<0.000000e+00> : vector<128xf32>
      %45 = vector.multi_reduction <add>, %44, %cst_32 [0] : vector<16x128xf32> to vector<128xf32>
      %46 = vector.shape_cast %45 : vector<128xf32> to vector<1x128xf32>
      %47 = arith.mulf %44, %44 : vector<16x128xf32>
      %cst_33 = arith.constant dense<0.000000e+00> : vector<128xf32>
      %48 = vector.multi_reduction <add>, %47, %cst_33 [0] : vector<16x128xf32> to vector<128xf32>
      %49 = vector.shape_cast %48 : vector<128xf32> to vector<1x128xf32>
      %50 = vector.broadcast %cst : f32 to vector<1x128xf32>
      %51 = arith.mulf %46, %50 : vector<1x128xf32>
      %52 = vector.broadcast %cst : f32 to vector<1x128xf32>
      %53 = arith.mulf %49, %52 : vector<1x128xf32>
      %54 = arith.mulf %51, %51 : vector<1x128xf32>
      %55 = arith.subf %53, %54 : vector<1x128xf32>
      %cst_34 = arith.constant 0.000000e+00 : f32
      %56 = vector.broadcast %cst_34 : f32 to vector<1x128xf32>
      %57 = arith.maximumf %55, %56 : vector<1x128xf32>
      %c0_35 = arith.constant 0 : index
      %c0_36 = arith.constant 0 : index
      %58 = vector.load %arg3[%c0_35, %c0_36] : memref<1x128xf32, #tpu.memory_space<vmem>>, vector<1x128xf32>
      %cst_37 = arith.constant 9.99999974E-6 : f32
      %59 = vector.broadcast %cst_37 : f32 to vector<1x128xf32>
      %60 = arith.addf %57, %59 : vector<1x128xf32>
      %61 = math.rsqrt %60 : vector<1x128xf32>
      %62 = arith.mulf %58, %61 : vector<1x128xf32>
      %c0_38 = arith.constant 0 : index
      %c0_39 = arith.constant 0 : index
      %63 = vector.load %arg4[%c0_38, %c0_39] : memref<1x128xf32, #tpu.memory_space<vmem>>, vector<1x128xf32>
      %64 = arith.mulf %51, %62 : vector<1x128xf32>
      %65 = arith.subf %63, %64 : vector<1x128xf32>
      %66 = vector.broadcast %62 : vector<1x128xf32> to vector<16x128xf32>
      %67 = arith.mulf %44, %66 : vector<16x128xf32>
      %68 = vector.broadcast %65 : vector<1x128xf32> to vector<16x128xf32>
      %69 = arith.addf %67, %68 : vector<16x128xf32>
      %cst_40 = arith.constant 0.000000e+00 : f32
      %70 = vector.broadcast %cst_40 : f32 to vector<16x128xf32>
      %71 = arith.maximumf %69, %70 : vector<16x128xf32>
      %c0_41 = arith.constant 0 : index
      %c0_42 = arith.constant 0 : index
      %72 = vector.load %arg9[%c0_41, %c0_42] : memref<16x128xf32, #tpu.memory_space<vmem>>, vector<16x128xf32>
      tpu.vector_store %arg9[%c0_41, %c0_42], %71 {strides = array<i32>} : memref<16x128xf32, #tpu.memory_space<vmem>>, vector<16x128xf32>,
    } else {
    }
    %c0 = arith.constant 0 : index
    %c0_1 = arith.constant 0 : index
    %3 = vector.load %arg9[%c0, %c0_1] : memref<16x128xf32, #tpu.memory_space<vmem>>, vector<16x128xf32>
    %c0_2 = arith.constant 0 : index
    %c0_3 = arith.constant 0 : index
    %4 = vector.load %arg5[%c0_2, %c0_3] : memref<128x128xf32, #tpu.memory_space<vmem>>, vector<128x128xf32>
    %cst_4 = arith.constant dense<0.000000e+00> : vector<16x128xf32>
    %5 = tpu.matmul %3, %4, %cst_4 {dimension_numbers = #tpu.dot_dimension_numbers<[1], [1], [0], [0], [0, 0, 1, 0], [], []>} : vector<16x128xf32>, vector<128x128xf32>, vector<16x128xf32> -> vector<16x128xf32>
    %cst_5 = arith.constant dense<0.000000e+00> : vector<128xf32>
    %6 = vector.multi_reduction <add>, %5, %cst_5 [0] : vector<16x128xf32> to vector<128xf32>
    %7 = vector.shape_cast %6 : vector<128xf32> to vector<1x128xf32>
    %8 = arith.mulf %5, %5 : vector<16x128xf32>
    %cst_6 = arith.constant dense<0.000000e+00> : vector<128xf32>
    %9 = vector.multi_reduction <add>, %8, %cst_6 [0] : vector<16x128xf32> to vector<128xf32>
    %10 = vector.shape_cast %9 : vector<128xf32> to vector<1x128xf32>
    %cst_7 = arith.constant 6.250000e-02 : f32
    %11 = vector.broadcast %cst_7 : f32 to vector<1x128xf32>
    %12 = arith.mulf %7, %11 : vector<1x128xf32>
    %cst_8 = arith.constant 6.250000e-02 : f32
    %13 = vector.broadcast %cst_8 : f32 to vector<1x128xf32>
    %14 = arith.mulf %10, %13 : vector<1x128xf32>
    %15 = arith.mulf %12, %12 : vector<1x128xf32>
    %16 = arith.subf %14, %15 : vector<1x128xf32>
    %cst_9 = arith.constant 0.000000e+00 : f32
    %17 = vector.broadcast %cst_9 : f32 to vector<1x128xf32>
    %18 = arith.maximumf %16, %17 : vector<1x128xf32>
    %19 = vector.broadcast %12 : vector<1x128xf32> to vector<16x128xf32>
    %20 = arith.subf %5, %19 : vector<16x128xf32>
    %cst_10 = arith.constant 9.99999974E-6 : f32
    %21 = vector.broadcast %cst_10 : f32 to vector<1x128xf32>
    %22 = arith.addf %18, %21 : vector<1x128xf32>
    %23 = math.rsqrt %22 : vector<1x128xf32>
    %24 = vector.broadcast %23 : vector<1x128xf32> to vector<16x128xf32>
    %25 = arith.mulf %20, %24 : vector<16x128xf32>
    %c0_11 = arith.constant 0 : index
    %c0_12 = arith.constant 0 : index
    %26 = vector.load %arg6[%c0_11, %c0_12] : memref<16x128xf32, #tpu.memory_space<vmem>>, vector<16x128xf32>
    tpu.vector_store %arg6[%c0_11, %c0_12], %25 {strides = array<i32>} : memref<16x128xf32, #tpu.memory_space<vmem>>, vector<16x128xf32>,
    return
  }
  func.func @transform_2(%arg0: i32) -> (i32, i32) {
    %c0_i32 = arith.constant 0 : i32
    %c0_i32_0 = arith.constant 0 : i32
    %c0_i32_1 = arith.constant 0 : i32
    return %c0_i32, %c0_i32_0 : i32, i32
  }
  func.func @transform_3(%arg0: i32) -> (i32, i32) {
    %c0_i32 = arith.constant 0 : i32
    %c0_i32_0 = arith.constant 0 : i32
    %c0_i32_1 = arith.constant 0 : i32
    return %c0_i32, %c0_i32_0 : i32, i32
  }
  func.func @transform_4(%arg0: i32) -> (i32, i32) {
    %c0_i32 = arith.constant 0 : i32
    %c0_i32_0 = arith.constant 0 : i32
    return %arg0, %c0_i32 : i32, i32
  }
  func.func @transform_5(%arg0: i32) -> (i32, i32) {
    %c0_i32 = arith.constant 0 : i32
    %c0_i32_0 = arith.constant 0 : i32
    return %c0_i32, %arg0 : i32, i32
  }
}

</mosaic_0001>

<llo_original>
// kernel: tpu_custom_call.1
$region0: #{tpu_custom_call.1}
  #allocation0 [shape = 'u32[]', space=smem, size = 0x4, offset = 0x4, fixed_abs, tag = 'smem constant byte address 0x4 - core index']
  #allocation1 [shape = 'u32[144,128]{1,0:T(1,128)}', space=vmem, size = 0x12000, scoped, tag = 'internal scratch']
  #allocation2 [shape = 'f32[16,128]{1,0:T(8,128)}', space=vmem, size = 0x2000, scoped, tag = 'scratch operand']
  #allocation3 [shape = 'f32[2,128,128]{2,1,0:T(8,128)}', space=vmem, size = 0x20000, scoped, tag = 'scratch operand']
  #allocation4 [shape = 'f32[16,128]{1,0:T(8,128)}', space=vmem, size = 0x2000, scoped, tag = 'scratch operand']
  #allocation5 [shape = 's32[3]{0}', space=sflag, size = 0xc, scoped, tag = 'scratch operand']
  #allocation10 [shape = 's32[]', space=sflag, size = 0x4, offset = 0, fixed_abs, tag = 'sflag constant byte address 0x0 - dummy sync flag']
  #allocation11 [shape = 's32[]', space=sflag, size = 0x4, offset = 0, fixed_abs, tag = 'sflag constant byte address 0x0 - dummy sync flag']
  #allocation12 [shape = 'u32[]', space=smem, size = 0x4, offset = 0x44, fixed_abs, tag = 'smem constant byte address 0x44 - assertion arg 0']
  #allocation13 [shape = 'u32[]', space=smem, size = 0x4, offset = 0x48, fixed_abs, tag = 'smem constant byte address 0x48 - assertion arg 1']
  #allocation14 [shape = 's32[]', space=sflag, size = 0x4, offset = 0, fixed_abs, tag = 'sflag constant byte address 0x0 - dummy sync flag']
  #allocation15 [shape = 's32[]', space=sflag, size = 0x4, offset = 0, fixed_abs, tag = 'sflag constant byte address 0x0 - dummy sync flag']
  %s0 = inlined_call_operand.hbm [shape: f32[16,128], index: 0, kind: input, shape index: {}]
  %s1 = inlined_call_operand.hbm [shape: f32[128,128], index: 1, kind: input, shape index: {}]
  %s2 = inlined_call_operand.vmem [shape: f32[1,128], index: 2, kind: input, shape index: {}]
  %s3 = inlined_call_operand.vmem [shape: f32[1,128], index: 3, kind: input, shape index: {}]
  %s4 = inlined_call_operand.hbm [shape: f32[128,128], index: 4, kind: input, shape index: {}]
  %s5 = inlined_call_operand.hbm [shape: f32[16,128], index: 5, kind: output, shape index: {}]
  %s6 = sld [smem:[#allocation0]]
  $region38: #{tpu_custom_call.1} parent=0
    _
  %s8 = ssub.s32 1, %s6
  %s9 = scalar_select 0, %s8, %s6
  $region1: #{tpu_custom_call.1} parent=0
    #allocation6 [shape = 'u8[65536]{0}', space=vmem, size = 0x10000, scoped, tag = 'input window, operand 4, single buffered']
    #allocation7 [shape = 's32[1]{0}', space=sflag, size = 0x4, scoped, tag = 'scoped memory for tpu_custom_call.1']
    #allocation8 [shape = 's32[1]{0}', space=sflag, size = 0x4, scoped, tag = 'scoped memory for tpu_custom_call.1']
    #allocation9 [shape = 'u8[8192]{0}', space=vmem, size = 0x2000, scoped, tag = 'output window, operand 0, single buffered']
    %10 = vsyncpa [#allocation7], 0
    %11 = vsyncpa [#allocation8], 0
    // Predicated region
    $region2: #{tpu_custom_call.1} parent=1 // pred_check
      _
    $region3: #{tpu_custom_call.1} parent=1 // pred_check_branch
      %13 = sbr.rel (0) target = $region5
    $region4: #{tpu_custom_call.1} parent=1 // pred_region
      _
    $region5: #{tpu_custom_call.1} parent=1 // pred_fallthru
      _
    // Predicated region
    $region6: #{tpu_custom_call.1} parent=1 // pred_check
      _
    $region7: #{tpu_custom_call.1} parent=1 // pred_check_branch
      %15 = sbr.rel (0) target = $region9
    $region8: #{tpu_custom_call.1} parent=1 // pred_region
      _
    $region9: #{tpu_custom_call.1} parent=1 // pred_fallthru
      _
    // Predicated region
    $region10: #{tpu_custom_call.1} parent=1 // pred_check
      _
    $region11: #{tpu_custom_call.1} parent=1 // pred_check_branch
      %17 = sbr.rel (0) target = $region13
    $region12: #{tpu_custom_call.1} parent=1 // pred_region
      %s19 = ssub.s32 2048, 2048
      %20 = vsyncadd [#allocation7], %s19
      %s21 = sshll.u32 [#allocation6], 4
      %s22 = int_to_ptr.vmem [resolvable:$true] %s21
      %27 = dma.hbm_to_vmem [thread:$0]  %s4, 2048, %s22, [#allocation7], 128, 128, 8
    $region13: #{tpu_custom_call.1} parent=1 // pred_fallthru
      _
    // Predicated region
    $region14: #{tpu_custom_call.1} parent=1 // pred_check
      _
    $region15: #{tpu_custom_call.1} parent=1 // pred_check_branch
      %29 = sbr.rel (0) target = $region17
    $region16: #{tpu_custom_call.1} parent=1 // pred_region
      %30 = dma.done [#allocation7], 2048
    $region17: #{tpu_custom_call.1} parent=1 // pred_fallthru
      _
    %p31 = scmp.eq.s32.totalorder 0, 0
    // Predicated region
    $region18: #{tpu_custom_call.1} parent=1 // pred_check
      %p32 = pneg %p31
    $region19: #{tpu_custom_call.1} parent=1 // pred_check_branch
      %34 = sbr.rel (%p32) target = $region21
    $region20: #{tpu_custom_call.1} parent=1 // pred_region
      %s35 = scalar_lea.sflag [#allocation5], 2
      // Predicated region
      $region22: #{tpu_custom_call.1} parent=20 // pred_check
        _
      $region23: #{tpu_custom_call.1} parent=20 // pred_check_branch
        %37 = sbr.rel target = $region25
      $region24: #{tpu_custom_call.1} parent=20 // pred_region
        %38 = sst [smem:[#allocation12]] [#allocation11]
        %39 = sst [smem:[#allocation13]] [#allocation10]
      $region25: #{tpu_custom_call.1} parent=20 // pred_fallthru
        _
      %41 = shalt.err (0)
      %s43 = sshll.u32 [#allocation2], 4
      %s44 = int_to_ptr.vmem [resolvable:$true] %s43
      %46 = dma.hbm_to_vmem [thread:$0]  %s0, 256, %s44, %s35
      // Predicated region
      $region26: #{tpu_custom_call.1} parent=20 // pred_check
        _
      $region27: #{tpu_custom_call.1} parent=20 // pred_check_branch
        %48 = sbr.rel target = $region29
      $region28: #{tpu_custom_call.1} parent=20 // pred_region
        %49 = sst [smem:[#allocation12]] [#allocation15]
        %50 = sst [smem:[#allocation13]] [#allocation14]
      $region29: #{tpu_custom_call.1} parent=20 // pred_fallthru
        _
      %52 = shalt.err (0)
      %s54 = sshll.u32 [#allocation3], 4
      %s55 = int_to_ptr.vmem [resolvable:$true] %s54
      %57 = dma.hbm_to_vmem [thread:$0]  %s1, 2048, %s55, [#allocation5]
      %s58 = smul.u32 16, 1
      %s59 = sshll.u32 %s58, 4
      %60 = dma.done %s35, %s59
      %s61 = smul.u32 128, 1
      %s62 = sshll.u32 %s61, 4
      %63 = dma.done [#allocation5], %s62
      %v64 = vld [vmem:[#allocation2] sm:$0xff]
      %v65 = vld [vmem:[#allocation2 + $0x8] sm:$0xff]
      %v66 = vld [vmem:[#allocation3] sm:$0xff]
      %v67 = vld [vmem:[#allocation3 + $0x8] sm:$0xff]
      %v68 = vld [vmem:[#allocation3 + $0x10] sm:$0xff]
      %v69 = vld [vmem:[#allocation3 + $0x18] sm:$0xff]
      %v70 = vld [vmem:[#allocation3 + $0x20] sm:$0xff]
      %v71 = vld [vmem:[#allocation3 + $0x28] sm:$0xff]
      %v72 = vld [vmem:[#allocation3 + $0x30] sm:$0xff]
      %v73 = vld [vmem:[#allocation3 + $0x38] sm:$0xff]
      %v74 = vld [vmem:[#allocation3 + $0x40] sm:$0xff]
      %v75 = vld [vmem:[#allocation3 + $0x48] sm:$0xff]
      %v76 = vld [vmem:[#allocation3 + $0x50] sm:$0xff]
      %v77 = vld [vmem:[#allocation3 + $0x58] sm:$0xff]
      %v78 = vld [vmem:[#allocation3 + $0x60] sm:$0xff]
      %v79 = vld [vmem:[#allocation3 + $0x68] sm:$0xff]
      %v80 = vld [vmem:[#allocation3 + $0x70] sm:$0xff]
      %v81 = vld [vmem:[#allocation3 + $0x78] sm:$0xff]
      %82 = vmatprep.subr.mxu0 0.0
      %83 = vmatpush1.xpose.msra.mxu0 %v81
      %84 = vmatprep.subr.mxu0 0.0
      %85 = vmatpush1.xpose.msra.mxu0 %v80
      %86 = vmatprep.subr.mxu0 0.0
      %87 = vmatpush1.xpose.msra.mxu0 %v79
      %88 = vmatprep.subr.mxu0 0.0
      %89 = vmatpush1.xpose.msra.mxu0 %v78
      %90 = vmatprep.subr.mxu0 0.0
      %91 = vmatpush1.xpose.msra.mxu0 %v77
      %92 = vmatprep.subr.mxu0 0.0
      %93 = vmatpush1.xpose.msra.mxu0 %v76
      %94 = vmatprep.subr.mxu0 0.0
      %95 = vmatpush1.xpose.msra.mxu0 %v75
      %96 = vmatprep.subr.mxu0 0.0
      %97 = vmatpush1.xpose.msra.mxu0 %v74
      %98 = vmatprep.subr.mxu0 0.0
      %99 = vmatpush1.xpose.msra.mxu0 %v73
      %100 = vmatprep.subr.mxu0 0.0
      %101 = vmatpush1.xpose.msra.mxu0 %v72
      %102 = vmatprep.subr.mxu0 0.0
      %103 = vmatpush1.xpose.msra.mxu0 %v71
      %104 = vmatprep.subr.mxu0 0.0
      %105 = vmatpush1.xpose.msra.mxu0 %v70
      %106 = vmatprep.subr.mxu0 0.0
      %107 = vmatpush1.xpose.msra.mxu0 %v69
      %108 = vmatprep.subr.mxu0 0.0
      %109 = vmatpush1.xpose.msra.mxu0 %v68
      %110 = vmatprep.subr.mxu0 0.0
      %111 = vmatpush1.xpose.msra.mxu0 %v67
      %112 = vmatprep.subr.mxu0 0.0
      %113 = vmatpush1.xpose.msra.mxu0 %v66
      %114 = vmatprep.subr.mxu0 0.0
      %115 = vmatpush2.xpose.msra.mxu0 0.0
      %116 = vmatprep.subr.mxu0 0.0
      %117 = vmatpush2.xpose.msra.mxu0 0.0
      %118 = vmatprep.subr.mxu0 0.0
      %119 = vmatpush2.xpose.msra.mxu0 0.0
      %120 = vmatprep.subr.mxu0 0.0
      %121 = vmatpush2.xpose.msra.mxu0 0.0
      %122 = vmatprep.subr.mxu0 0.0
      %123 = vmatpush2.xpose.msra.mxu0 0.0
      %124 = vmatprep.subr.mxu0 0.0
      %125 = vmatpush2.xpose.msra.mxu0 0.0
      %126 = vmatprep.subr.mxu0 0.0
      %127 = vmatpush2.xpose.msra.mxu0 0.0
      %128 = vmatprep.subr.mxu0 0.0
      %129 = vmatpush2.xpose.msra.mxu0 0.0
      %130 = vmatprep.subr.mxu0 0.0
      %131 = vmatpush2.xpose.msra.mxu0 0.0
      %132 = vmatprep.subr.mxu0 0.0
      %133 = vmatpush2.xpose.msra.mxu0 0.0
      %134 = vmatprep.subr.mxu0 0.0
      %135 = vmatpush2.xpose.msra.mxu0 0.0
      %136 = vmatprep.subr.mxu0 0.0
      %137 = vmatpush2.xpose.msra.mxu0 0.0
      %138 = vmatprep.subr.mxu0 0.0
      %139 = vmatpush2.xpose.msra.mxu0 0.0
      %140 = vmatprep.subr.mxu0 0.0
      %141 = vmatpush2.xpose.msra.mxu0 0.0
      %142 = vmatprep.subr.mxu0 0.0
      %143 = vmatpush2.xpose.msra.mxu0 0.0
      %144 = vmatprep.subr.mxu0 0.0
      %145 = vmatpush2.xpose.msra.mxu0 0.0
      %146 = vmatprep.mubr.f32.mxu0 0.0
      %147 = vmatmul.mubr.f32.gmra.mxu0 %v64
      %v148 = vpop.f32.mrf.mxu0
      %v149 = vadd.f32 0.0, %v148
      %v150 = vpop.f32.mrf.mxu0
      %151 = vmatprep.mubr.f32.mxu0 0.0
      %152 = vmatmul.mubr.f32.gmra.mxu0 %v65
      %v153 = vpop.f32.mrf.mxu0
      %v154 = vadd.f32 0.0, %v153
      %v155 = vpop.f32.mrf.mxu0
      %156 = vdwg.mxu0
      %v157 = vadd.f32 %v149, %v154
      %v158 = vrot.slane %v157, 4
      %v159 = vadd.f32 %v157, %v158
      %v160 = vrot.slane %v159, 2
      %v161 = vadd.f32 %v159, %v160
      %v162 = vrot.slane %v161, 1
      %v163 = vadd.f32 %v161, %v162
      %v164 = vmul.f32 %v149, %v149
      %v165 = vmul.f32 %v154, %v154
      %v166 = vadd.f32 %v164, %v165
      %v167 = vrot.slane %v166, 4
      %v168 = vadd.f32 %v166, %v167
      %v169 = vrot.slane %v168, 2
      %v170 = vadd.f32 %v168, %v169
      %v171 = vrot.slane %v170, 1
      %v172 = vadd.f32 %v170, %v171
      %v173 = vmul.f32 %v163, 0.0625
      %v174 = vmul.f32 %v172, 0.0625
      %v175 = vmul.f32 %v173, %v173
      %v176 = vsub.f32 %v174, %v175
      %v177 = vmax.f32 %v176, 0.0
      %v178 = vld [vmem:[%s2] sm:$0x1]
      %v179 = vadd.f32 %v177, 1e-05
      %v180 = vrsqrt.pop %v179
      %v181 = vmul.f32 %v178, %v180
      %v182 = vld [vmem:[%s3] sm:$0x1]
      %v183 = vmul.f32 %v173, %v181
      %v184 = vsub.f32 %v182, %v183
      %v186 = vlaneseq
      %v187 = vshrl.u32 %v186, 7
      %v188 = vsub.s32 0, %v187
      %v189 = vrot.slane %v181, %v188
      %v191 = vmul.f32 %v149, %v189
      %v192 = vmul.f32 %v154, %v189
      %v194 = vlaneseq
      %v195 = vshrl.u32 %v194, 7
      %v196 = vsub.s32 0, %v195
      %v197 = vrot.slane %v184, %v196
      %v199 = vadd.f32 %v191, %v197
      %v200 = vadd.f32 %v192, %v197
      %v201 = vmax.f32 %v199, 0.0
      %v202 = vmax.f32 %v200, 0.0
      %203 = vst [vmem:[#allocation4] sm:$0xff] %v201
      %204 = vst [vmem:[#allocation4 + $0x8] sm:$0xff] %v202
    $region21: #{tpu_custom_call.1} parent=1 // pred_fallthru
      _
    %v205 = vld [vmem:[#allocation4] sm:$0xff]
    %v206 = vld [vmem:[#allocation4 + $0x8] sm:$0xff]
    %v207 = vld [vmem:[#allocation6] sm:$0xff]
    %v208 = vld [vmem:[#allocation6 + $0x8] sm:$0xff]
    %v209 = vld [vmem:[#allocation6 + $0x10] sm:$0xff]
    %v210 = vld [vmem:[#allocation6 + $0x18] sm:$0xff]
    %v211 = vld [vmem:[#allocation6 + $0x20] sm:$0xff]
    %v212 = vld [vmem:[#allocation6 + $0x28] sm:$0xff]
    %v213 = vld [vmem:[#allocation6 + $0x30] sm:$0xff]
    %v214 = vld [vmem:[#allocation6 + $0x38] sm:$0xff]
    %v215 = vld [vmem:[#allocation6 + $0x40] sm:$0xff]
    %v216 = vld [vmem:[#allocation6 + $0x48] sm:$0xff]
    %v217 = vld [vmem:[#allocation6 + $0x50] sm:$0xff]
    %v218 = vld [vmem:[#allocation6 + $0x58] sm:$0xff]
    %v219 = vld [vmem:[#allocation6 + $0x60] sm:$0xff]
    %v220 = vld [vmem:[#allocation6 + $0x68] sm:$0xff]
    %v221 = vld [vmem:[#allocation6 + $0x70] sm:$0xff]
    %v222 = vld [vmem:[#allocation6 + $0x78] sm:$0xff]
    %223 = vmatprep.subr.mxu0 0.0
    %224 = vmatpush1.xpose.msra.mxu0 %v222
    %225 = vmatprep.subr.mxu0 0.0
    %226 = vmatpush1.xpose.msra.mxu0 %v221
    %227 = vmatprep.subr.mxu0 0.0
    %228 = vmatpush1.xpose.msra.mxu0 %v220
    %229 = vmatprep.subr.mxu0 0.0
    %230 = vmatpush1.xpose.msra.mxu0 %v219
    %231 = vmatprep.subr.mxu0 0.0
    %232 = vmatpush1.xpose.msra.mxu0 %v218
    %233 = vmatprep.subr.mxu0 0.0
    %234 = vmatpush1.xpose.msra.mxu0 %v217
    %235 = vmatprep.subr.mxu0 0.0
    %236 = vmatpush1.xpose.msra.mxu0 %v216
    %237 = vmatprep.subr.mxu0 0.0
    %238 = vmatpush1.xpose.msra.mxu0 %v215
    %239 = vmatprep.subr.mxu0 0.0
    %240 = vmatpush1.xpose.msra.mxu0 %v214
    %241 = vmatprep.subr.mxu0 0.0
    %242 = vmatpush1.xpose.msra.mxu0 %v213
    %243 = vmatprep.subr.mxu0 0.0
    %244 = vmatpush1.xpose.msra.mxu0 %v212
    %245 = vmatprep.subr.mxu0 0.0
    %246 = vmatpush1.xpose.msra.mxu0 %v211
    %247 = vmatprep.subr.mxu0 0.0
    %248 = vmatpush1.xpose.msra.mxu0 %v210
    %249 = vmatprep.subr.mxu0 0.0
    %250 = vmatpush1.xpose.msra.mxu0 %v209
    %251 = vmatprep.subr.mxu0 0.0
    %252 = vmatpush1.xpose.msra.mxu0 %v208
    %253 = vmatprep.subr.mxu0 0.0
    %254 = vmatpush1.xpose.msra.mxu0 %v207
    %255 = vmatprep.subr.mxu0 0.0
    %256 = vmatpush2.xpose.msra.mxu0 0.0
    %257 = vmatprep.subr.mxu0 0.0
    %258 = vmatpush2.xpose.msra.mxu0 0.0
    %259 = vmatprep.subr.mxu0 0.0
    %260 = vmatpush2.xpose.msra.mxu0 0.0
    %261 = vmatprep.subr.mxu0 0.0
    %262 = vmatpush2.xpose.msra.mxu0 0.0
    %263 = vmatprep.subr.mxu0 0.0
    %264 = vmatpush2.xpose.msra.mxu0 0.0
    %265 = vmatprep.subr.mxu0 0.0
    %266 = vmatpush2.xpose.msra.mxu0 0.0
    %267 = vmatprep.subr.mxu0 0.0
    %268 = vmatpush2.xpose.msra.mxu0 0.0
    %269 = vmatprep.subr.mxu0 0.0
    %270 = vmatpush2.xpose.msra.mxu0 0.0
    %271 = vmatprep.subr.mxu0 0.0
    %272 = vmatpush2.xpose.msra.mxu0 0.0
    %273 = vmatprep.subr.mxu0 0.0
    %274 = vmatpush2.xpose.msra.mxu0 0.0
    %275 = vmatprep.subr.mxu0 0.0
    %276 = vmatpush2.xpose.msra.mxu0 0.0
    %277 = vmatprep.subr.mxu0 0.0
    %278 = vmatpush2.xpose.msra.mxu0 0.0
    %279 = vmatprep.subr.mxu0 0.0
    %280 = vmatpush2.xpose.msra.mxu0 0.0
    %281 = vmatprep.subr.mxu0 0.0
    %282 = vmatpush2.xpose.msra.mxu0 0.0
    %283 = vmatprep.subr.mxu0 0.0
    %284 = vmatpush2.xpose.msra.mxu0 0.0
    %285 = vmatprep.subr.mxu0 0.0
    %286 = vmatpush2.xpose.msra.mxu0 0.0
    %287 = vmatprep.mubr.f32.mxu0 0.0
    %288 = vmatmul.mubr.f32.gmra.mxu0 %v205
    %v289 = vpop.f32.mrf.mxu0
    %v290 = vadd.f32 0.0, %v289
    %v291 = vpop.f32.mrf.mxu0
    %292 = vmatprep.mubr.f32.mxu0 0.0
    %293 = vmatmul.mubr.f32.gmra.mxu0 %v206
    %v294 = vpop.f32.mrf.mxu0
    %v295 = vadd.f32 0.0, %v294
    %v296 = vpop.f32.mrf.mxu0
    %297 = vdwg.mxu0
    %v298 = vadd.f32 %v290, %v295
    %v299 = vrot.slane %v298, 4
    %v300 = vadd.f32 %v298, %v299
    %v301 = vrot.slane %v300, 2
    %v302 = vadd.f32 %v300, %v301
    %v303 = vrot.slane %v302, 1
    %v304 = vadd.f32 %v302, %v303
    %v305 = vmul.f32 %v290, %v290
    %v306 = vmul.f32 %v295, %v295
    %v307 = vadd.f32 %v305, %v306
    %v308 = vrot.slane %v307, 4
    %v309 = vadd.f32 %v307, %v308
    %v310 = vrot.slane %v309, 2
    %v311 = vadd.f32 %v309, %v310
    %v312 = vrot.slane %v311, 1
    %v313 = vadd.f32 %v311, %v312
    %v314 = vmul.f32 %v304, 0.0625
    %v315 = vmul.f32 %v313, 0.0625
    %v316 = vmul.f32 %v314, %v314
    %v317 = vsub.f32 %v315, %v316
    %v318 = vmax.f32 %v317, 0.0
    %v319 = vsub.f32 %v290, %v314
    %v320 = vsub.f32 %v295, %v314
    %v321 = vadd.f32 %v318, 1e-05
    %v322 = vrsqrt.pop %v321
    %v323 = vmul.f32 %v319, %v322
    %v324 = vmul.f32 %v320, %v322
    %325 = vst [vmem:[#allocation9] sm:$0xff] %v323
    %326 = vst [vmem:[#allocation9 + $0x8] sm:$0xff] %v324
    // Predicated region
    $region30: #{tpu_custom_call.1} parent=1 // pred_check
      _
    $region31: #{tpu_custom_call.1} parent=1 // pred_check_branch
      %328 = sbr.rel (0) target = $region33
    $region32: #{tpu_custom_call.1} parent=1 // pred_region
      %s330 = ssub.s32 256, 256
      %331 = vsyncadd [#allocation8], %s330
      %s332 = sshll.u32 [#allocation9], 4
      %s333 = int_to_ptr.vmem [resolvable:$true] %s332
      %338 = dma.vmem_to_hbm [thread:$0]  %s333, 256, %s5, [#allocation8], 128, 128, 8
    $region33: #{tpu_custom_call.1} parent=1 // pred_fallthru
      _
    // Predicated region
    $region34: #{tpu_custom_call.1} parent=1 // pred_check
      _
    $region35: #{tpu_custom_call.1} parent=1 // pred_check_branch
      %340 = sbr.rel (0) target = $region37
    $region36: #{tpu_custom_call.1} parent=1 // pred_region
      %341 = dma.done [#allocation8], 256
    $region37: #{tpu_custom_call.1} parent=1 // pred_fallthru
      _
    %342 = vsyncpa [#allocation7], 1
    %343 = vsyncpa [#allocation8], 1
  %344 = vsyncmov [#allocation5]
  %s345 = vpop.sfrf %344
  %p346 = scmp.eq.s32.totalorder %s345, 0
  %p347 = pneg %p346
  %349 = shalt.err (%p347)
  %s350 = scalar_lea.sflag [#allocation5], 1
  %351 = vsyncmov %s350
  %s352 = vpop.sfrf %351
  %p353 = scmp.eq.s32.totalorder %s352, 0
  %p354 = pneg %p353
  %356 = shalt.err (%p354)
  %s357 = scalar_lea.sflag [#allocation5], 2
  %358 = vsyncmov %s357
  %s359 = vpop.sfrf %358
  %p360 = scmp.eq.s32.totalorder %s359, 0
  %p361 = pneg %p360
  %363 = shalt.err (%p361)

</llo_original>
